<compile_context>
chip_gen: v6e
topology: v6e:2x2x1
jax: 0.10.0
libtpu: 0.0.40
codegen_flags: <defaults>
</compile_context>

<pallas_src>
import math
from functools import partial

import jax
import jax.numpy as jnp
from jax.experimental import pallas as pl
from jax.experimental.pallas import tpu as pltpu


def _round_up(a, b):
    return (a + b - 1) // b * b


def _mlp_kernel(x_ref, w13_ref, b13_ref, w2_ref, b2_ref, o_ref, acc_ref, *, ti):
    j = pl.program_id(1)

    @pl.when(j == 0)
    def _init():
        acc_ref[...] = jnp.zeros_like(acc_ref)

    x = x_ref[...]                                            # (tm, D)

    # Fused up-projection: one MXU weight stream for [W1 | W3] of inter tile j.
    h = jnp.dot(x, w13_ref[...], preferred_element_type=jnp.float32)   # (tm, 2*ti)
    h = h + b13_ref[pl.ds(j, 1), :]                          # resident bias row (1, 2*ti)

    h1 = h[:, :ti]                                           # static, 128-aligned split
    h3 = h[:, ti:]

    # SiLU(h1) * h3 in fp32 (sigmoid goes to the EUP slot); cast to W2's dtype so the
    # down-projection uses bf16 MXU passes whenever the weights are bf16.
    g = (h1 * jax.nn.sigmoid(h1)) * h3                       # (tm, ti) fp32
    acc_ref[...] += jnp.dot(g.astype(w2_ref.dtype), w2_ref[...],
                            preferred_element_type=jnp.float32)

    @pl.when(j == pl.num_programs(1) - 1)
    def _finalize():
        o_ref[...] = (acc_ref[...] + b2_ref[...]).astype(o_ref.dtype)


def mlp_forward(x, w1, b1, w2, b2, w3, b3, *,
                tm=None, ti=None, matmul_dtype=None, vmem_limit_bytes=None):
    """SwiGLU MLP with PyTorch-layout weights.

    x       : (..., D)
    w1, w3  : (I, D)   b1, b3 : (I,)
    w2      : (D, I)   b2     : (D,)
    """
    orig_shape = x.shape
    D = orig_shape[-1]
    I = w1.shape[0]
    assert w1.shape == (I, D) and w3.shape == (I, D) and w2.shape == (D, I)
    M = math.prod(orig_shape[:-1]) if len(orig_shape) > 1 else 1

    out_dtype = x.dtype
    if matmul_dtype is not None:
        x = x.astype(matmul_dtype)
        w1 = w1.astype(matmul_dtype)
        w2 = w2.astype(matmul_dtype)
        w3 = w3.astype(matmul_dtype)
    x2d = x.reshape(M, D)

    # --- VMEM budget (per-core capacity minus headroom for Mosaic scratch) ---------
    if vmem_limit_bytes is None:
        try:
            cap = int(pltpu.get_tpu_info().vmem_capacity_bytes)
        except Exception:
            cap = 64 * 1024 * 1024          # conservative fallback, safe on all parts
        vmem_limit_bytes = min(cap - 8 * 1024 * 1024, 112 * 1024 * 1024)
    vmem_limit_bytes = int(vmem_limit_bytes)

    # --- tile selection -------------------------------------------------------------
    cbytes = jnp.dtype(x2d.dtype).itemsize
    wbytes = jnp.dtype(w1.dtype).itemsize
    obytes = jnp.dtype(out_dtype).itemsize
    row_granule = max(8, 32 // cbytes)      # native sublane packing (8 f32, 16 bf16)

    if tm is None:
        if M >= 1024:
            tm = 512                        # amortize W1/W3/W2 re-streaming (MXU-bound)
        elif M >= 256:
            tm = _round_up(-(-M // 2), 128)  # >= 2 row blocks -> both v7x TCs busy
        else:
            tm = _round_up(M, row_granule)
    else:
        tm = _round_up(tm, row_granule)

    if ti is None:
        ti = I                              # full inter dim if nothing better divides
        for cand in range(min(1024, (I // 128) * 128), 127, -128):
            if I % cand == 0:
                ti = cand
                break
    assert I % ti == 0 and (ti % 128 == 0 or ti == I), (I, ti)

    def vmem_est(tm_, ti_):
        # double-buffered x / [W1|W3] / W2 tiles + output tile, fp32 acc, resident biases
        return (2 * (tm_ * D * cbytes + 3 * ti_ * D * wbytes + tm_ * D * obytes)
                + tm_ * D * 4 + (2 * I + D) * 4)

    budget = int(0.85 * vmem_limit_bytes)
    # Prefer shrinking ti (only affects step count / weight-tile VMEM), keep tm large.
    while (vmem_est(tm, ti) > budget and ti > 128
           and I % (ti // 2) == 0 and (ti // 2) % 128 == 0):
        ti //= 2
    while vmem_est(tm, ti) > budget and tm > 128:
        tm = max(128, _round_up(tm // 2, row_granule))

    # --- pad rows so M is a multiple of tm -------------------------------------------
    Mp = _round_up(M, tm)
    if Mp != M:
        x2d = jnp.pad(x2d, ((0, Mp - M), (0, 0)))

    # --- pack weights: interleave W1/W3 per inter tile -> one DMA stream / matmul ----
    nti = I // ti
    w13 = jnp.concatenate(
        [w1.T.reshape(D, nti, ti), w3.T.reshape(D, nti, ti)], axis=-1
    ).reshape(D, 2 * I)                                       # block j = [W1_j | W3_j]
    b13 = jnp.concatenate(
        [b1.reshape(nti, ti), b3.reshape(nti, ti)], axis=-1
    ).astype(jnp.float32)                                     # (nti, 2*ti), resident
    w2t = w2.T                                                # (I, D)
    b2r = b2.reshape(1, D).astype(jnp.float32)

    grid = (Mp // tm, nti)

    out2d = pl.pallas_call(
        partial(_mlp_kernel, ti=ti),
        out_shape=jax.ShapeDtypeStruct((Mp, D), out_dtype),
        grid_spec=pltpu.PrefetchScalarGridSpec(
            num_scalar_prefetch=0,
            grid=grid,
            in_specs=[
                pl.BlockSpec((tm, D), lambda i, j: (i, 0)),        # x rows
                pl.BlockSpec((D, 2 * ti), lambda i, j: (0, j)),    # [W1|W3] tile
                pl.BlockSpec((nti, 2 * ti), lambda i, j: (0, 0)),  # b1||b3, resident
                pl.BlockSpec((ti, D), lambda i, j: (j, 0)),        # W2^T tile
                pl.BlockSpec((1, D), lambda i, j: (0, 0)),         # b2, resident
            ],
            out_specs=pl.BlockSpec((tm, D), lambda i, j: (i, 0)),
            scratch_shapes=[pltpu.VMEM((tm, D), jnp.float32)],     # fp32 accumulator
        ),
        compiler_params=pltpu.CompilerParams(
            dimension_semantics=("parallel", "arbitrary"),
            vmem_limit_bytes=vmem_limit_bytes,
        ),
    )(x2d, w13, b13, w2t, b2r)

    if Mp != M:
        out2d = out2d[:M]
    return out2d.reshape(orig_shape)


def mlp_reference(x, w1, b1, w2, b2, w3, b3):
    """Pure-JAX fp32 reference mirroring the PyTorch module."""
    with jax.default_matmul_precision("highest"):
        x = x.astype(jnp.float32)
        h1 = x @ w1.T.astype(jnp.float32) + b1
        h3 = x @ w3.T.astype(jnp.float32) + b3
        return (jax.nn.silu(h1) * h3) @ w2.T.astype(jnp.float32) + b2


if __name__ == "__main__":
    key = jax.random.PRNGKey(0)

    def init_linear(k, out_f, in_f):
        kw, kb = jax.random.split(k)
        bound = 1.0 / math.sqrt(in_f)
        w = jax.random.uniform(kw, (out_f, in_f), jnp.float32, -bound, bound)
        b = jax.random.uniform(kb, (out_f,), jnp.float32, -bound, bound)
        return w, b

    def run_case(name, B, S, DIM, INTER, k, *, x_dtype=jnp.float32,
                 matmul_dtype=None, tol=1e-3, **kw):
        k1, k2, k3, kx = jax.random.split(k, 4)
        W1, b1 = init_linear(k1, INTER, DIM)
        W2, b2 = init_linear(k2, DIM, INTER)
        W3, b3 = init_linear(k3, INTER, DIM)
        x = jax.random.normal(kx, (B, S, DIM), jnp.float32)

        ref = mlp_reference(x, W1, b1, W2, b2, W3, b3)
        out = mlp_forward(x.astype(x_dtype),
                          W1.astype(x_dtype), b1,
                          W2.astype(x_dtype), b2,
                          W3.astype(x_dtype), b3,
                          matmul_dtype=matmul_dtype, **kw)
        out = jax.block_until_ready(out).astype(jnp.float32)
        assert out.shape == ref.shape, (name, out.shape, ref.shape)
        err = float(jnp.max(jnp.abs(out - ref)))
        assert err < tol, f"{name}: max abs err {err} >= {tol}"

    keys = jax.random.split(key, 5)

    # 1) small module-sized fp32 run (B=2, S=16, dim=128, inter=512)
    run_case("fp32", 2, 16, 128, 512, keys[0], tol=1e-3)

    # 2) bf16 inputs/weights, fp32 accumulation inside the kernel
    run_case("bf16", 2, 16, 128, 512, keys[1],
             x_dtype=jnp.bfloat16, tol=3e-2)

    # 3) fp32 inputs with bf16 matmul operands (matmul_dtype flag)
    run_case("fp32-in/bf16-mxu", 2, 16, 128, 512, keys[2],
             matmul_dtype=jnp.bfloat16, tol=3e-2)

    # 4) multi-tile: 2 row blocks x 2 inter blocks (exercises the fp32 accumulator)
    run_case("multi-tile", 4, 64, 256, 1024, keys[3], ti=512, tol=1e-3)

    # 5) ragged rows (M not a multiple of the tile) -> padding path
    run_case("ragged", 2, 13, 128, 512, keys[4], tol=1e-3)

    print("KERNEL_OK")
</pallas_src>

<mosaic_0001>
module attributes {stable_mosaic.version = 11 : i64} {
  func.func @_mlp_kernel(%arg0: i32, %arg1: i32, %arg2: memref<32x128xf32, #tpu.memory_space<vmem>>, %arg3: memref<128x1024xf32, #tpu.memory_space<vmem>>, %arg4: memref<1x1024xf32, #tpu.memory_space<vmem>>, %arg5: memref<512x128xf32, #tpu.memory_space<vmem>>, %arg6: memref<1x128xf32, #tpu.memory_space<vmem>>, %arg7: memref<32x128xf32, #tpu.memory_space<vmem>>, %arg8: memref<32x128xf32, #tpu.memory_space<vmem>>) attributes {dimension_semantics = [#tpu.dimension_semantics<parallel>, #tpu.dimension_semantics<arbitrary>], iteration_bounds = array<i64: 1, 1>, scalar_prefetch = 0 : i64, scratch_operands = 1 : i64, tpu.core_type = #tpu.core_type<tc>, window_params = [{transform_indices = @transform_0, window_bounds = array<i64: 32, 128>}, {transform_indices = @transform_1, window_bounds = array<i64: 128, 1024>}, {pipeline_mode = #tpu.pipeline_mode<synchronous>, transform_indices = @transform_2, window_bounds = array<i64: 1, 1024>}, {transform_indices = @transform_3, window_bounds = array<i64: 512, 128>}, {pipeline_mode = #tpu.pipeline_mode<synchronous>, transform_indices = @transform_4, window_bounds = array<i64: 1, 128>}, {transform_indices = @transform_5, window_bounds = array<i64: 32, 128>}]} {
    %c0_i32 = arith.constant 0 : i32
    %0 = arith.cmpi eq, %arg1, %c0_i32 : i32
    %1 = arith.extui %0 : i1 to i32
    %c0_i32_0 = arith.constant 0 : i32
    %2 = arith.cmpi ne, %1, %c0_i32_0 : i32
    scf.if %2 {
      %cst_15 = arith.constant 0.000000e+00 : f32
      %27 = vector.broadcast %cst_15 : f32 to vector<32x128xf32>
      %c0_16 = arith.constant 0 : index
      %c0_17 = arith.constant 0 : index
      %28 = vector.load %arg8[%c0_16, %c0_17] : memref<32x128xf32, #tpu.memory_space<vmem>>, vector<32x128xf32>
      tpu.vector_store %arg8[%c0_16, %c0_17], %27 {strides = array<i32>} : memref<32x128xf32, #tpu.memory_space<vmem>>, vector<32x128xf32>,
    } else {
    }
    %c0 = arith.constant 0 : index
    %c0_1 = arith.constant 0 : index
    %3 = vector.load %arg2[%c0, %c0_1] : memref<32x128xf32, #tpu.memory_space<vmem>>, vector<32x128xf32>
    %c0_2 = arith.constant 0 : index
    %c0_3 = arith.constant 0 : index
    %4 = vector.load %arg3[%c0_2, %c0_3] : memref<128x1024xf32, #tpu.memory_space<vmem>>, vector<128x1024xf32>
    %cst = arith.constant dense<0.000000e+00> : vector<32x1024xf32>
    %5 = tpu.matmul %3, %4, %cst {dimension_numbers = #tpu.dot_dimension_numbers<[1], [0], [0], [1], [0, 0, 1, 1], [], []>} : vector<32x128xf32>, vector<128x1024xf32>, vector<32x1024xf32> -> vector<32x1024xf32>
    %6 = arith.index_cast %arg1 : i32 to index
    %c0_4 = arith.constant 0 : index
    %7 = vector.load %arg4[%6, %c0_4] : memref<1x1024xf32, #tpu.memory_space<vmem>>, vector<1x1024xf32>
    %8 = vector.broadcast %7 : vector<1x1024xf32> to vector<32x1024xf32>
    %9 = arith.addf %5, %8 : vector<32x1024xf32>
    %10 = vector.extract_strided_slice %9 {offsets = [0, 0], sizes = [32, 512], strides = [1, 1]} : vector<32x1024xf32> to vector<32x512xf32>
    %11 = vector.extract_strided_slice %9 {offsets = [0, 512], sizes = [32, 512], strides = [1, 1]} : vector<32x1024xf32> to vector<32x512xf32>
    %12 = arith.negf %10 : vector<32x512xf32>
    %13 = math.exp %12 : vector<32x512xf32>
    %cst_5 = arith.constant 1.000000e+00 : f32
    %14 = vector.broadcast %cst_5 : f32 to vector<32x512xf32>
    %15 = arith.addf %14, %13 : vector<32x512xf32>
    %16 = arith.divf %14, %15 : vector<32x512xf32>
    %17 = arith.mulf %10, %16 : vector<32x512xf32>
    %18 = arith.mulf %17, %11 : vector<32x512xf32>
    %c0_6 = arith.constant 0 : index
    %c0_7 = arith.constant 0 : index
    %19 = vector.load %arg8[%c0_6, %c0_7] : memref<32x128xf32, #tpu.memory_space<vmem>>, vector<32x128xf32>
    %c0_8 = arith.constant 0 : index
    %c0_9 = arith.constant 0 : index
    %20 = vector.load %arg5[%c0_8, %c0_9] : memref<512x128xf32, #tpu.memory_space<vmem>>, vector<512x128xf32>
    %cst_10 = arith.constant dense<0.000000e+00> : vector<32x128xf32>
    %21 = tpu.matmul %18, %20, %cst_10 {dimension_numbers = #tpu.dot_dimension_numbers<[1], [0], [0], [1], [0, 0, 1, 1], [], []>} : vector<32x512xf32>, vector<512x128xf32>, vector<32x128xf32> -> vector<32x128xf32>
    %22 = arith.addf %19, %21 : vector<32x128xf32>
    %c0_11 = arith.constant 0 : index
    %c0_12 = arith.constant 0 : index
    %23 = vector.load %arg8[%c0_11, %c0_12] : memref<32x128xf32, #tpu.memory_space<vmem>>, vector<32x128xf32>
    tpu.vector_store %arg8[%c0_11, %c0_12], %22 {strides = array<i32>} : memref<32x128xf32, #tpu.memory_space<vmem>>, vector<32x128xf32>,
    %c0_i32_13 = arith.constant 0 : i32
    %24 = arith.cmpi eq, %arg1, %c0_i32_13 : i32
    %25 = arith.extui %24 : i1 to i32
    %c0_i32_14 = arith.constant 0 : i32
    %26 = arith.cmpi ne, %25, %c0_i32_14 : i32
    scf.if %26 {
      %c0_15 = arith.constant 0 : index
      %c0_16 = arith.constant 0 : index
      %27 = vector.load %arg8[%c0_15, %c0_16] : memref<32x128xf32, #tpu.memory_space<vmem>>, vector<32x128xf32>
      %c0_17 = arith.constant 0 : index
      %c0_18 = arith.constant 0 : index
      %28 = vector.load %arg6[%c0_17, %c0_18] : memref<1x128xf32, #tpu.memory_space<vmem>>, vector<1x128xf32>
      %29 = vector.broadcast %28 : vector<1x128xf32> to vector<32x128xf32>
      %30 = arith.addf %27, %29 : vector<32x128xf32>
      %c0_19 = arith.constant 0 : index
      %c0_20 = arith.constant 0 : index
      %31 = vector.load %arg7[%c0_19, %c0_20] : memref<32x128xf32, #tpu.memory_space<vmem>>, vector<32x128xf32>
      tpu.vector_store %arg7[%c0_19, %c0_20], %30 {strides = array<i32>} : memref<32x128xf32, #tpu.memory_space<vmem>>, vector<32x128xf32>,
    } else {
    }
    return
  }
  func.func @transform_0(%arg0: i32, %arg1: i32) -> (i32, i32) {
    %c0_i32 = arith.constant 0 : i32
    %c0_i32_0 = arith.constant 0 : i32
    return %arg0, %c0_i32 : i32, i32
  }
  func.func @transform_1(%arg0: i32, %arg1: i32) -> (i32, i32) {
    %c0_i32 = arith.constant 0 : i32
    %c0_i32_0 = arith.constant 0 : i32
    return %c0_i32, %arg1 : i32, i32
  }
  func.func @transform_2(%arg0: i32, %arg1: i32) -> (i32, i32) {
    %c0_i32 = arith.constant 0 : i32
    %c0_i32_0 = arith.constant 0 : i32
    %c0_i32_1 = arith.constant 0 : i32
    return %c0_i32, %c0_i32_0 : i32, i32
  }
  func.func @transform_3(%arg0: i32, %arg1: i32) -> (i32, i32) {
    %c0_i32 = arith.constant 0 : i32
    %c0_i32_0 = arith.constant 0 : i32
    return %arg1, %c0_i32 : i32, i32
  }
  func.func @transform_4(%arg0: i32, %arg1: i32) -> (i32, i32) {
    %c0_i32 = arith.constant 0 : i32
    %c0_i32_0 = arith.constant 0 : i32
    %c0_i32_1 = arith.constant 0 : i32
    return %c0_i32, %c0_i32_0 : i32, i32
  }
  func.func @transform_5(%arg0: i32, %arg1: i32) -> (i32, i32) {
    %c0_i32 = arith.constant 0 : i32
    %c0_i32_0 = arith.constant 0 : i32
    return %arg0, %c0_i32 : i32, i32
  }
}

</mosaic_0001>

<llo_original>
// kernel: tpu_custom_call.1
$region0: #{tpu_custom_call.1}
  #allocation0 [shape = 'u32[]', space=smem, size = 0x4, offset = 0x4, fixed_abs, tag = 'smem constant byte address 0x4 - core index']
  #allocation1 [shape = 'u32[144,128]{1,0:T(1,128)}', space=vmem, size = 0x12000, scoped, tag = 'internal scratch']
  #allocation2 [shape = 'f32[32,128]{1,0:T(8,128)}', space=vmem, size = 0x4000, scoped, tag = 'scratch operand']
  %s0 = inlined_call_operand.hbm [shape: f32[32,128], index: 0, kind: input, shape index: {}]
  %s1 = inlined_call_operand.hbm [shape: f32[128,1024], index: 1, kind: input, shape index: {}]
  %s2 = inlined_call_operand.hbm [shape: f32[1,1024], index: 2, kind: input, shape index: {}]
  %s3 = inlined_call_operand.hbm [shape: f32[512,128], index: 3, kind: input, shape index: {}]
  %s4 = inlined_call_operand.vmem [shape: f32[1,128], index: 4, kind: input, shape index: {}]
  %s5 = inlined_call_operand.hbm [shape: f32[32,128], index: 5, kind: output, shape index: {}]
  %s6 = sld [smem:[#allocation0]]
  $region54: #{tpu_custom_call.1} parent=0
    _
  %s8 = ssub.s32 1, %s6
  %s9 = scalar_select 0, %s8, %s6
  $region1: #{tpu_custom_call.1} parent=0
    #allocation3 [shape = 'u8[16384]{0}', space=vmem, size = 0x4000, scoped, tag = 'input window, operand 0, single buffered']
    #allocation4 [shape = 's32[1]{0}', space=sflag, size = 0x4, scoped, tag = 'scoped memory for tpu_custom_call.1']
    #allocation5 [shape = 's32[1]{0}', space=sflag, size = 0x4, scoped, tag = 'scoped memory for tpu_custom_call.1']
    #allocation6 [shape = 'u8[524288]{0}', space=vmem, size = 0x80000, scoped, tag = 'input window, operand 1, single buffered']
    #allocation7 [shape = 's32[1]{0}', space=sflag, size = 0x4, scoped, tag = 'scoped memory for tpu_custom_call.1']
    #allocation8 [shape = 'u8[4096]{0}', space=vmem, size = 0x1000, scoped, tag = 'input window, operand 2, single buffered']
    #allocation9 [shape = 'u8[262144]{0}', space=vmem, size = 0x40000, scoped, tag = 'input window, operand 3, single buffered']
    #allocation10 [shape = 's32[1]{0}', space=sflag, size = 0x4, scoped, tag = 'scoped memory for tpu_custom_call.1']
    #allocation11 [shape = 'u8[16384]{0}', space=vmem, size = 0x4000, scoped, tag = 'output window, operand 0, single buffered']
    %10 = vsyncpa [#allocation4], 0
    %11 = vsyncpa [#allocation7], 0
    %12 = vsyncpa [#allocation10], 0
    %13 = vsyncpa [#allocation5], 0
    // Predicated region
    $region2: #{tpu_custom_call.1} parent=1 // pred_check
      _
    $region3: #{tpu_custom_call.1} parent=1 // pred_check_branch
      %15 = sbr.rel (0) target = $region5
    $region4: #{tpu_custom_call.1} parent=1 // pred_region
      %s17 = ssub.s32 512, 512
      %18 = vsyncadd [#allocation4], %s17
      %s19 = sshll.u32 [#allocation3], 4
      %s20 = int_to_ptr.vmem [resolvable:$true] %s19
      %25 = dma.hbm_to_vmem [thread:$0]  %s0, 512, %s20, [#allocation4], 128, 128, 8
    $region5: #{tpu_custom_call.1} parent=1 // pred_fallthru
      _
    // Predicated region
    $region6: #{tpu_custom_call.1} parent=1 // pred_check
      _
    $region7: #{tpu_custom_call.1} parent=1 // pred_check_branch
      %27 = sbr.rel (0) target = $region9
    $region8: #{tpu_custom_call.1} parent=1 // pred_region
      %s29 = ssub.s32 16384, 16384
      %30 = vsyncadd [#allocation7], %s29
      %s31 = sshll.u32 [#allocation6], 4
      %s32 = int_to_ptr.vmem [resolvable:$true] %s31
      %37 = dma.hbm_to_vmem [thread:$0]  %s1, 16384, %s32, [#allocation7], 1024, 1024, 64
    $region9: #{tpu_custom_call.1} parent=1 // pred_fallthru
      _
    // Predicated region
    $region10: #{tpu_custom_call.1} parent=1 // pred_check
      _
    $region11: #{tpu_custom_call.1} parent=1 // pred_check_branch
      %39 = sbr.rel (0) target = $region13
    $region12: #{tpu_custom_call.1} parent=1 // pred_region
      %s41 = ssub.s32 128, 128
      %42 = vsyncadd [#allocation7], %s41
      %s44 = sshll.u32 [#allocation8], 4
      %s45 = int_to_ptr.vmem [resolvable:$true] %s44
      %47 = dma.hbm_to_vmem [thread:$0]  %s2, 128, %s45, [#allocation7]
    $region13: #{tpu_custom_call.1} parent=1 // pred_fallthru
      _
    // Predicated region
    $region14: #{tpu_custom_call.1} parent=1 // pred_check
      _
    $region15: #{tpu_custom_call.1} parent=1 // pred_check_branch
      %49 = sbr.rel (0) target = $region17
    $region16: #{tpu_custom_call.1} parent=1 // pred_region
      %s51 = ssub.s32 8192, 8192
      %52 = vsyncadd [#allocation10], %s51
      %s53 = sshll.u32 [#allocation9], 4
      %s54 = int_to_ptr.vmem [resolvable:$true] %s53
      %59 = dma.hbm_to_vmem [thread:$0]  %s3, 8192, %s54, [#allocation10], 128, 128, 8
    $region17: #{tpu_custom_call.1} parent=1 // pred_fallthru
      _
    // Predicated region
    $region18: #{tpu_custom_call.1} parent=1 // pred_check
      _
    $region19: #{tpu_custom_call.1} parent=1 // pred_check_branch
      %61 = sbr.rel (0) target = $region21
    $region20: #{tpu_custom_call.1} parent=1 // pred_region
      _
    $region21: #{tpu_custom_call.1} parent=1 // pred_fallthru
      _
    // Predicated region
    $region22: #{tpu_custom_call.1} parent=1 // pred_check
      _
    $region23: #{tpu_custom_call.1} parent=1 // pred_check_branch
      %63 = sbr.rel (0) target = $region25
    $region24: #{tpu_custom_call.1} parent=1 // pred_region
      %64 = dma.done [#allocation4], 512
    $region25: #{tpu_custom_call.1} parent=1 // pred_fallthru
      _
    // Predicated region
    $region26: #{tpu_custom_call.1} parent=1 // pred_check
      _
    $region27: #{tpu_custom_call.1} parent=1 // pred_check_branch
      %66 = sbr.rel (0) target = $region29
    $region28: #{tpu_custom_call.1} parent=1 // pred_region
      %67 = dma.done [#allocation7], 16384
    $region29: #{tpu_custom_call.1} parent=1 // pred_fallthru
      _
    // Predicated region
    $region30: #{tpu_custom_call.1} parent=1 // pred_check
      _
    $region31: #{tpu_custom_call.1} parent=1 // pred_check_branch
      %69 = sbr.rel (0) target = $region33
    $region32: #{tpu_custom_call.1} parent=1 // pred_region
      %70 = dma.done [#allocation7], 128
    $region33: #{tpu_custom_call.1} parent=1 // pred_fallthru
      _
    // Predicated region
    $region34: #{tpu_custom_call.1} parent=1 // pred_check
      _
    $region35: #{tpu_custom_call.1} parent=1 // pred_check_branch
      %72 = sbr.rel (0) target = $region37
    $region36: #{tpu_custom_call.1} parent=1 // pred_region
      %73 = dma.done [#allocation10], 8192
    $region37: #{tpu_custom_call.1} parent=1 // pred_fallthru
      _
    %p74 = scmp.eq.s32.totalorder 0, 0
    // Predicated region
    $region38: #{tpu_custom_call.1} parent=1 // pred_check
      %p75 = pneg %p74
    $region39: #{tpu_custom_call.1} parent=1 // pred_check_branch
      %77 = sbr.rel (%p75) target = $region41
    $region40: #{tpu_custom_call.1} parent=1 // pred_region
      %78 = vst [vmem:[#allocation2] sm:$0xff] 0.0
      %79 = vst [vmem:[#allocation2 + $0x8] sm:$0xff] 0.0
      %80 = vst [vmem:[#allocation2 + $0x10] sm:$0xff] 0.0
      %81 = vst [vmem:[#allocation2 + $0x18] sm:$0xff] 0.0
    $region41: #{tpu_custom_call.1} parent=1 // pred_fallthru
      _
    %v82 = vld [vmem:[#allocation3] sm:$0xff]
    %v83 = vld [vmem:[#allocation3 + $0x8] sm:$0xff]
    %v84 = vld [vmem:[#allocation3 + $0x10] sm:$0xff]
    %v85 = vld [vmem:[#allocation3 + $0x18] sm:$0xff]
    %v86 = vld [vmem:[#allocation6] sm:$0xff]
    %v87 = vld [vmem:[#allocation6 + $0x8] sm:$0xff]
    %v88 = vld [vmem:[#allocation6 + $0x10] sm:$0xff]
    %v89 = vld [vmem:[#allocation6 + $0x18] sm:$0xff]
    %v90 = vld [vmem:[#allocation6 + $0x20] sm:$0xff]
    %v91 = vld [vmem:[#allocation6 + $0x28] sm:$0xff]
    %v92 = vld [vmem:[#allocation6 + $0x30] sm:$0xff]
    %v93 = vld [vmem:[#allocation6 + $0x38] sm:$0xff]
    %v94 = vld [vmem:[#allocation6 + $0x40] sm:$0xff]
    %v95 = vld [vmem:[#allocation6 + $0x48] sm:$0xff]
    %v96 = vld [vmem:[#allocation6 + $0x50] sm:$0xff]
    %v97 = vld [vmem:[#allocation6 + $0x58] sm:$0xff]
    %v98 = vld [vmem:[#allocation6 + $0x60] sm:$0xff]
    %v99 = vld [vmem:[#allocation6 + $0x68] sm:$0xff]
    %v100 = vld [vmem:[#allocation6 + $0x70] sm:$0xff]
    %v101 = vld [vmem:[#allocation6 + $0x78] sm:$0xff]
    %v102 = vld [vmem:[#allocation6 + $0x80] sm:$0xff]
    %v103 = vld [vmem:[#allocation6 + $0x88] sm:$0xff]
    %v104 = vld [vmem:[#allocation6 + $0x90] sm:$0xff]
    %v105 = vld [vmem:[#allocation6 + $0x98] sm:$0xff]
    %v106 = vld [vmem:[#allocation6 + $0xa0] sm:$0xff]
    %v107 = vld [vmem:[#allocation6 + $0xa8] sm:$0xff]
    %v108 = vld [vmem:[#allocation6 + $0xb0] sm:$0xff]
    %v109 = vld [vmem:[#allocation6 + $0xb8] sm:$0xff]
    %v110 = vld [vmem:[#allocation6 + $0xc0] sm:$0xff]
    %v111 = vld [vmem:[#allocation6 + $0xc8] sm:$0xff]
    %v112 = vld [vmem:[#allocation6 + $0xd0] sm:$0xff]
    %v113 = vld [vmem:[#allocation6 + $0xd8] sm:$0xff]
    %v114 = vld [vmem:[#allocation6 + $0xe0] sm:$0xff]
    %v115 = vld [vmem:[#allocation6 + $0xe8] sm:$0xff]
    %v116 = vld [vmem:[#allocation6 + $0xf0] sm:$0xff]
    %v117 = vld [vmem:[#allocation6 + $0xf8] sm:$0xff]
    %v118 = vld [vmem:[#allocation6 + $0x100] sm:$0xff]
    %v119 = vld [vmem:[#allocation6 + $0x108] sm:$0xff]
    %v120 = vld [vmem:[#allocation6 + $0x110] sm:$0xff]
    %v121 = vld [vmem:[#allocation6 + $0x118] sm:$0xff]
    %v122 = vld [vmem:[#allocation6 + $0x120] sm:$0xff]
    %v123 = vld [vmem:[#allocation6 + $0x128] sm:$0xff]
    %v124 = vld [vmem:[#allocation6 + $0x130] sm:$0xff]
    %v125 = vld [vmem:[#allocation6 + $0x138] sm:$0xff]
    %v126 = vld [vmem:[#allocation6 + $0x140] sm:$0xff]
    %v127 = vld [vmem:[#allocation6 + $0x148] sm:$0xff]
    %v128 = vld [vmem:[#allocation6 + $0x150] sm:$0xff]
    %v129 = vld [vmem:[#allocation6 + $0x158] sm:$0xff]
    %v130 = vld [vmem:[#allocation6 + $0x160] sm:$0xff]
    %v131 = vld [vmem:[#allocation6 + $0x168] sm:$0xff]
    %v132 = vld [vmem:[#allocation6 + $0x170] sm:$0xff]
    %v133 = vld [vmem:[#allocation6 + $0x178] sm:$0xff]
    %v134 = vld [vmem:[#allocation6 + $0x180] sm:$0xff]
    %v135 = vld [vmem:[#allocation6 + $0x188] sm:$0xff]
    %v136 = vld [vmem:[#allocation6 + $0x190] sm:$0xff]
    %v137 = vld [vmem:[#allocation6 + $0x198] sm:$0xff]
    %v138 = vld [vmem:[#allocation6 + $0x1a0] sm:$0xff]
    %v139 = vld [vmem:[#allocation6 + $0x1a8] sm:$0xff]
    %v140 = vld [vmem:[#allocation6 + $0x1b0] sm:$0xff]
    %v141 = vld [vmem:[#allocation6 + $0x1b8] sm:$0xff]
    %v142 = vld [vmem:[#allocation6 + $0x1c0] sm:$0xff]
    %v143 = vld [vmem:[#allocation6 + $0x1c8] sm:$0xff]
    %v144 = vld [vmem:[#allocation6 + $0x1d0] sm:$0xff]
    %v145 = vld [vmem:[#allocation6 + $0x1d8] sm:$0xff]
    %v146 = vld [vmem:[#allocation6 + $0x1e0] sm:$0xff]
    %v147 = vld [vmem:[#allocation6 + $0x1e8] sm:$0xff]
    %v148 = vld [vmem:[#allocation6 + $0x1f0] sm:$0xff]
    %v149 = vld [vmem:[#allocation6 + $0x1f8] sm:$0xff]
    %v150 = vld [vmem:[#allocation6 + $0x200] sm:$0xff]
    %v151 = vld [vmem:[#allocation6 + $0x208] sm:$0xff]
    %v152 = vld [vmem:[#allocation6 + $0x210] sm:$0xff]
    %v153 = vld [vmem:[#allocation6 + $0x218] sm:$0xff]
    %v154 = vld [vmem:[#allocation6 + $0x220] sm:$0xff]
    %v155 = vld [vmem:[#allocation6 + $0x228] sm:$0xff]
    %v156 = vld [vmem:[#allocation6 + $0x230] sm:$0xff]
    %v157 = vld [vmem:[#allocation6 + $0x238] sm:$0xff]
    %v158 = vld [vmem:[#allocation6 + $0x240] sm:$0xff]
    %v159 = vld [vmem:[#allocation6 + $0x248] sm:$0xff]
    %v160 = vld [vmem:[#allocation6 + $0x250] sm:$0xff]
    %v161 = vld [vmem:[#allocation6 + $0x258] sm:$0xff]
    %v162 = vld [vmem:[#allocation6 + $0x260] sm:$0xff]
    %v163 = vld [vmem:[#allocation6 + $0x268] sm:$0xff]
    %v164 = vld [vmem:[#allocation6 + $0x270] sm:$0xff]
    %v165 = vld [vmem:[#allocation6 + $0x278] sm:$0xff]
    %v166 = vld [vmem:[#allocation6 + $0x280] sm:$0xff]
    %v167 = vld [vmem:[#allocation6 + $0x288] sm:$0xff]
    %v168 = vld [vmem:[#allocation6 + $0x290] sm:$0xff]
    %v169 = vld [vmem:[#allocation6 + $0x298] sm:$0xff]
    %v170 = vld [vmem:[#allocation6 + $0x2a0] sm:$0xff]
    %v171 = vld [vmem:[#allocation6 + $0x2a8] sm:$0xff]
    %v172 = vld [vmem:[#allocation6 + $0x2b0] sm:$0xff]
    %v173 = vld [vmem:[#allocation6 + $0x2b8] sm:$0xff]
    %v174 = vld [vmem:[#allocation6 + $0x2c0] sm:$0xff]
    %v175 = vld [vmem:[#allocation6 + $0x2c8] sm:$0xff]
    %v176 = vld [vmem:[#allocation6 + $0x2d0] sm:$0xff]
    %v177 = vld [vmem:[#allocation6 + $0x2d8] sm:$0xff]
    %v178 = vld [vmem:[#allocation6 + $0x2e0] sm:$0xff]
    %v179 = vld [vmem:[#allocation6 + $0x2e8] sm:$0xff]
    %v180 = vld [vmem:[#allocation6 + $0x2f0] sm:$0xff]
    %v181 = vld [vmem:[#allocation6 + $0x2f8] sm:$0xff]
    %v182 = vld [vmem:[#allocation6 + $0x300] sm:$0xff]
    %v183 = vld [vmem:[#allocation6 + $0x308] sm:$0xff]
    %v184 = vld [vmem:[#allocation6 + $0x310] sm:$0xff]
    %v185 = vld [vmem:[#allocation6 + $0x318] sm:$0xff]
    %v186 = vld [vmem:[#allocation6 + $0x320] sm:$0xff]
    %v187 = vld [vmem:[#allocation6 + $0x328] sm:$0xff]
    %v188 = vld [vmem:[#allocation6 + $0x330] sm:$0xff]
    %v189 = vld [vmem:[#allocation6 + $0x338] sm:$0xff]
    %v190 = vld [vmem:[#allocation6 + $0x340] sm:$0xff]
    %v191 = vld [vmem:[#allocation6 + $0x348] sm:$0xff]
    %v192 = vld [vmem:[#allocation6 + $0x350] sm:$0xff]
    %v193 = vld [vmem:[#allocation6 + $0x358] sm:$0xff]
    %v194 = vld [vmem:[#allocation6 + $0x360] sm:$0xff]
    %v195 = vld [vmem:[#allocation6 + $0x368] sm:$0xff]
    %v196 = vld [vmem:[#allocation6 + $0x370] sm:$0xff]
    %v197 = vld [vmem:[#allocation6 + $0x378] sm:$0xff]
    %v198 = vld [vmem:[#allocation6 + $0x380] sm:$0xff]
    %v199 = vld [vmem:[#allocation6 + $0x388] sm:$0xff]
    %v200 = vld [vmem:[#allocation6 + $0x390] sm:$0xff]
    %v201 = vld [vmem:[#allocation6 + $0x398] sm:$0xff]
    %v202 = vld [vmem:[#allocation6 + $0x3a0] sm:$0xff]
    %v203 = vld [vmem:[#allocation6 + $0x3a8] sm:$0xff]
    %v204 = vld [vmem:[#allocation6 + $0x3b0] sm:$0xff]
    %v205 = vld [vmem:[#allocation6 + $0x3b8] sm:$0xff]
    %v206 = vld [vmem:[#allocation6 + $0x3c0] sm:$0xff]
    %v207 = vld [vmem:[#allocation6 + $0x3c8] sm:$0xff]
    %v208 = vld [vmem:[#allocation6 + $0x3d0] sm:$0xff]
    %v209 = vld [vmem:[#allocation6 + $0x3d8] sm:$0xff]
    %v210 = vld [vmem:[#allocation6 + $0x3e0] sm:$0xff]
    %v211 = vld [vmem:[#allocation6 + $0x3e8] sm:$0xff]
    %v212 = vld [vmem:[#allocation6 + $0x3f0] sm:$0xff]
    %v213 = vld [vmem:[#allocation6 + $0x3f8] sm:$0xff]
    %s214 = smul.u32 0, 8
    %s215 = scalar_lea.vmem [#allocation8], %s214
    %v216 = vld [vmem:[%s215] sm:$0xff]
    %v218 = vlaneseq
    %v219 = vshrl.u32 %v218, 7
    %v220 = vsub.s32 0, %v219
    %v221 = vrot.slane %v216, %v220
    %v222 = vlaneseq
    %v223 = vshrl.u32 %v222, 7
    %v224 = vsub.s32 1, %v223
    %v225 = vrot.slane %v216, %v224
    %v226 = vlaneseq
    %v227 = vshrl.u32 %v226, 7
    %v228 = vsub.s32 2, %v227
    %v229 = vrot.slane %v216, %v228
    %v230 = vlaneseq
    %v231 = vshrl.u32 %v230, 7
    %v232 = vsub.s32 3, %v231
    %v233 = vrot.slane %v216, %v232
    %v234 = vlaneseq
    %v235 = vshrl.u32 %v234, 7
    %v236 = vsub.s32 4, %v235
    %v237 = vrot.slane %v216, %v236
    %v238 = vlaneseq
    %v239 = vshrl.u32 %v238, 7
    %v240 = vsub.s32 5, %v239
    %v241 = vrot.slane %v216, %v240
    %v242 = vlaneseq
    %v243 = vshrl.u32 %v242, 7
    %v244 = vsub.s32 6, %v243
    %v245 = vrot.slane %v216, %v244
    %v246 = vlaneseq
    %v247 = vshrl.u32 %v246, 7
    %v248 = vsub.s32 7, %v247
    %v249 = vrot.slane %v216, %v248
    %258 = vmatprep.subr.mxu0 %v207
    %259 = vmatpush1.msra.mxu0 %v206
    %260 = vmatprep.subr.mxu0 %v199
    %261 = vmatpush1.msra.mxu0 %v198
    %262 = vmatprep.subr.mxu0 %v191
    %263 = vmatpush1.msra.mxu0 %v190
    %264 = vmatprep.subr.mxu0 %v183
    %265 = vmatpush1.msra.mxu0 %v182
    %266 = vmatprep.subr.mxu0 %v175
    %267 = vmatpush1.msra.mxu0 %v174
    %268 = vmatprep.subr.mxu0 %v167
    %269 = vmatpush1.msra.mxu0 %v166
    %270 = vmatprep.subr.mxu0 %v159
    %271 = vmatpush1.msra.mxu0 %v158
    %272 = vmatprep.subr.mxu0 %v151
    %273 = vmatpush1.msra.mxu0 %v150
    %274 = vmatprep.subr.mxu0 %v143
    %275 = vmatpush1.msra.mxu0 %v142
    %276 = vmatprep.subr.mxu0 %v135
    %277 = vmatpush1.msra.mxu0 %v134
    %278 = vmatprep.subr.mxu0 %v127
    %279 = vmatpush1.msra.mxu0 %v126
    %280 = vmatprep.subr.mxu0 %v119
    %281 = vmatpush1.msra.mxu0 %v118
    %282 = vmatprep.subr.mxu0 %v111
    %283 = vmatpush1.msra.mxu0 %v110
    %284 = vmatprep.subr.mxu0 %v103
    %285 = vmatpush1.msra.mxu0 %v102
    %286 = vmatprep.subr.mxu0 %v95
    %287 = vmatpush1.msra.mxu0 %v94
    %288 = vmatprep.subr.mxu0 %v87
    %289 = vmatpush1.msra.mxu0 %v86
    %290 = vmatprep.subr.mxu0 0.0
    %291 = vmatpush2.msra.mxu0 0.0
    %292 = vmatprep.subr.mxu0 0.0
    %293 = vmatpush2.msra.mxu0 0.0
    %294 = vmatprep.subr.mxu0 0.0
    %295 = vmatpush2.msra.mxu0 0.0
    %296 = vmatprep.subr.mxu0 0.0
    %297 = vmatpush2.msra.mxu0 0.0
    %298 = vmatprep.subr.mxu0 0.0
    %299 = vmatpush2.msra.mxu0 0.0
    %300 = vmatprep.subr.mxu0 0.0
    %301 = vmatpush2.msra.mxu0 0.0
    %302 = vmatprep.subr.mxu0 0.0
    %303 = vmatpush2.msra.mxu0 0.0
    %304 = vmatprep.subr.mxu0 0.0
    %305 = vmatpush2.msra.mxu0 0.0
    %306 = vmatprep.subr.mxu0 0.0
    %307 = vmatpush2.msra.mxu0 0.0
    %308 = vmatprep.subr.mxu0 0.0
    %309 = vmatpush2.msra.mxu0 0.0
    %310 = vmatprep.subr.mxu0 0.0
    %311 = vmatpush2.msra.mxu0 0.0
    %312 = vmatprep.subr.mxu0 0.0
    %313 = vmatpush2.msra.mxu0 0.0
    %314 = vmatprep.subr.mxu0 0.0
    %315 = vmatpush2.msra.mxu0 0.0
    %316 = vmatprep.subr.mxu0 0.0
    %317 = vmatpush2.msra.mxu0 0.0
    %318 = vmatprep.subr.mxu0 0.0
    %319 = vmatpush2.msra.mxu0 0.0
    %320 = vmatprep.subr.mxu0 0.0
    %321 = vmatpush2.msra.mxu0 0.0
    %322 = vmatprep.mubr.f32.mxu0 0.0
    %323 = vmatmul.mubr.f32.gmra.mxu0 %v82
    %v324 = vpop.f32.mrf.mxu0
    %v325 = vadd.f32 %v221, %v324
    %v326 = vpop.f32.mrf.mxu0
    %v327 = vadd.f32 %v225, %v326
    %328 = vmatprep.mubr.f32.mxu0 0.0
    %329 = vmatmul.mubr.f32.gmra.mxu0 %v83
    %v330 = vpop.f32.mrf.mxu0
    %v331 = vadd.f32 %v221, %v330
    %v332 = vpop.f32.mrf.mxu0
    %v333 = vadd.f32 %v225, %v332
    %334 = vmatprep.mubr.f32.mxu0 0.0
    %335 = vmatmul.mubr.f32.gmra.mxu0 %v84
    %v336 = vpop.f32.mrf.mxu0
    %v337 = vadd.f32 %v221, %v336
    %v338 = vpop.f32.mrf.mxu0
    %v339 = vadd.f32 %v225, %v338
    %340 = vmatprep.mubr.f32.mxu0 0.0
    %341 = vmatmul.mubr.f32.gmra.mxu0 %v85
    %v342 = vpop.f32.mrf.mxu0
    %v343 = vadd.f32 %v221, %v342
    %v344 = vpop.f32.mrf.mxu0
    %v345 = vadd.f32 %v225, %v344
    %346 = vdwg.mxu0
    %347 = vmatprep.subr.mxu0 %v209
    %348 = vmatpush1.msra.mxu0 %v208
    %349 = vmatprep.subr.mxu0 %v201
    %350 = vmatpush1.msra.mxu0 %v200
    %351 = vmatprep.subr.mxu0 %v193
    %352 = vmatpush1.msra.mxu0 %v192
    %353 = vmatprep.subr.mxu0 %v185
    %354 = vmatpush1.msra.mxu0 %v184
    %355 = vmatprep.subr.mxu0 %v177
    %356 = vmatpush1.msra.mxu0 %v176
    %357 = vmatprep.subr.mxu0 %v169
    %358 = vmatpush1.msra.mxu0 %v168
    %359 = vmatprep.subr.mxu0 %v161
    %360 = vmatpush1.msra.mxu0 %v160
    %361 = vmatprep.subr.mxu0 %v153
    %362 = vmatpush1.msra.mxu0 %v152
    %363 = vmatprep.subr.mxu0 %v145
    %364 = vmatpush1.msra.mxu0 %v144
    %365 = vmatprep.subr.mxu0 %v137
    %366 = vmatpush1.msra.mxu0 %v136
    %367 = vmatprep.subr.mxu0 %v129
    %368 = vmatpush1.msra.mxu0 %v128
    %369 = vmatprep.subr.mxu0 %v121
    %370 = vmatpush1.msra.mxu0 %v120
    %371 = vmatprep.subr.mxu0 %v113
    %372 = vmatpush1.msra.mxu0 %v112
    %373 = vmatprep.subr.mxu0 %v105
    %374 = vmatpush1.msra.mxu0 %v104
    %375 = vmatprep.subr.mxu0 %v97
    %376 = vmatpush1.msra.mxu0 %v96
    %377 = vmatprep.subr.mxu0 %v89
    %378 = vmatpush1.msra.mxu0 %v88
    %379 = vmatprep.subr.mxu0 0.0
    %380 = vmatpush2.msra.mxu0 0.0
    %381 = vmatprep.subr.mxu0 0.0
    %382 = vmatpush2.msra.mxu0 0.0
    %383 = vmatprep.subr.mxu0 0.0
    %384 = vmatpush2.msra.mxu0 0.0
    %385 = vmatprep.subr.mxu0 0.0
    %386 = vmatpush2.msra.mxu0 0.0
    %387 = vmatprep.subr.mxu0 0.0
    %388 = vmatpush2.msra.mxu0 0.0
    %389 = vmatprep.subr.mxu0 0.0
    %390 = vmatpush2.msra.mxu0 0.0
    %391 = vmatprep.subr.mxu0 0.0
    %392 = vmatpush2.msra.mxu0 0.0
    %393 = vmatprep.subr.mxu0 0.0
    %394 = vmatpush2.msra.mxu0 0.0
    %395 = vmatprep.subr.mxu0 0.0
    %396 = vmatpush2.msra.mxu0 0.0
    %397 = vmatprep.subr.mxu0 0.0
    %398 = vmatpush2.msra.mxu0 0.0
    %399 = vmatprep.subr.mxu0 0.0
    %400 = vmatpush2.msra.mxu0 0.0
    %401 = vmatprep.subr.mxu0 0.0
    %402 = vmatpush2.msra.mxu0 0.0
    %403 = vmatprep.subr.mxu0 0.0
    %404 = vmatpush2.msra.mxu0 0.0
    %405 = vmatprep.subr.mxu0 0.0
    %406 = vmatpush2.msra.mxu0 0.0
    %407 = vmatprep.subr.mxu0 0.0
    %408 = vmatpush2.msra.mxu0 0.0
    %409 = vmatprep.subr.mxu0 0.0
    %410 = vmatpush2.msra.mxu0 0.0
    %411 = vmatprep.mubr.f32.mxu0 0.0
    %412 = vmatmul.mubr.f32.gmra.mxu0 %v82
    %v413 = vpop.f32.mrf.mxu0
    %v414 = vadd.f32 %v229, %v413
    %v415 = vpop.f32.mrf.mxu0
    %v416 = vadd.f32 %v233, %v415
    %417 = vmatprep.mubr.f32.mxu0 0.0
    %418 = vmatmul.mubr.f32.gmra.mxu0 %v83
    %v419 = vpop.f32.mrf.mxu0
    %v420 = vadd.f32 %v229, %v419
    %v421 = vpop.f32.mrf.mxu0
    %v422 = vadd.f32 %v233, %v421
    %423 = vmatprep.mubr.f32.mxu0 0.0
    %424 = vmatmul.mubr.f32.gmra.mxu0 %v84
    %v425 = vpop.f32.mrf.mxu0
    %v426 = vadd.f32 %v229, %v425
    %v427 = vpop.f32.mrf.mxu0
    %v428 = vadd.f32 %v233, %v427
    %429 = vmatprep.mubr.f32.mxu0 0.0
    %430 = vmatmul.mubr.f32.gmra.mxu0 %v85
    %v431 = vpop.f32.mrf.mxu0
    %v432 = vadd.f32 %v229, %v431
    %v433 = vpop.f32.mrf.mxu0
    %v434 = vadd.f32 %v233, %v433
    %435 = vdwg.mxu0
    %436 = vmatprep.subr.mxu0 %v211
    %437 = vmatpush1.msra.mxu0 %v210
    %438 = vmatprep.subr.mxu0 %v203
    %439 = vmatpush1.msra.mxu0 %v202
    %440 = vmatprep.subr.mxu0 %v195
    %441 = vmatpush1.msra.mxu0 %v194
    %442 = vmatprep.subr.mxu0 %v187
    %443 = vmatpush1.msra.mxu0 %v186
    %444 = vmatprep.subr.mxu0 %v179
    %445 = vmatpush1.msra.mxu0 %v178
    %446 = vmatprep.subr.mxu0 %v171
    %447 = vmatpush1.msra.mxu0 %v170
    %448 = vmatprep.subr.mxu0 %v163
    %449 = vmatpush1.msra.mxu0 %v162
    %450 = vmatprep.subr.mxu0 %v155
    %451 = vmatpush1.msra.mxu0 %v154
    %452 = vmatprep.subr.mxu0 %v147
    %453 = vmatpush1.msra.mxu0 %v146
    %454 = vmatprep.subr.mxu0 %v139
    %455 = vmatpush1.msra.mxu0 %v138
    %456 = vmatprep.subr.mxu0 %v131
    %457 = vmatpush1.msra.mxu0 %v130
    %458 = vmatprep.subr.mxu0 %v123
    %459 = vmatpush1.msra.mxu0 %v122
    %460 = vmatprep.subr.mxu0 %v115
    %461 = vmatpush1.msra.mxu0 %v114
    %462 = vmatprep.subr.mxu0 %v107
    %463 = vmatpush1.msra.mxu0 %v106
    %464 = vmatprep.subr.mxu0 %v99
    %465 = vmatpush1.msra.mxu0 %v98
    %466 = vmatprep.subr.mxu0 %v91
    %467 = vmatpush1.msra.mxu0 %v90
    %468 = vmatprep.subr.mxu0 0.0
    %469 = vmatpush2.msra.mxu0 0.0
    %470 = vmatprep.subr.mxu0 0.0
    %471 = vmatpush2.msra.mxu0 0.0
    %472 = vmatprep.subr.mxu0 0.0
    %473 = vmatpush2.msra.mxu0 0.0
    %474 = vmatprep.subr.mxu0 0.0
    %475 = vmatpush2.msra.mxu0 0.0
    %476 = vmatprep.subr.mxu0 0.0
    %477 = vmatpush2.msra.mxu0 0.0
    %478 = vmatprep.subr.mxu0 0.0
    %479 = vmatpush2.msra.mxu0 0.0
    %480 = vmatprep.subr.mxu0 0.0
    %481 = vmatpush2.msra.mxu0 0.0
    %482 = vmatprep.subr.mxu0 0.0
    %483 = vmatpush2.msra.mxu0 0.0
    %484 = vmatprep.subr.mxu0 0.0
    %485 = vmatpush2.msra.mxu0 0.0
    %486 = vmatprep.subr.mxu0 0.0
    %487 = vmatpush2.msra.mxu0 0.0
    %488 = vmatprep.subr.mxu0 0.0
    %489 = vmatpush2.msra.mxu0 0.0
    %490 = vmatprep.subr.mxu0 0.0
    %491 = vmatpush2.msra.mxu0 0.0
    %492 = vmatprep.subr.mxu0 0.0
    %493 = vmatpush2.msra.mxu0 0.0
    %494 = vmatprep.subr.mxu0 0.0
    %495 = vmatpush2.msra.mxu0 0.0
    %496 = vmatprep.subr.mxu0 0.0
    %497 = vmatpush2.msra.mxu0 0.0
    %498 = vmatprep.subr.mxu0 0.0
    %499 = vmatpush2.msra.mxu0 0.0
    %500 = vmatprep.mubr.f32.mxu0 0.0
    %501 = vmatmul.mubr.f32.gmra.mxu0 %v82
    %v502 = vpop.f32.mrf.mxu0
    %v503 = vadd.f32 %v237, %v502
    %v504 = vpop.f32.mrf.mxu0
    %v505 = vadd.f32 %v241, %v504
    %506 = vmatprep.mubr.f32.mxu0 0.0
    %507 = vmatmul.mubr.f32.gmra.mxu0 %v83
    %v508 = vpop.f32.mrf.mxu0
    %v509 = vadd.f32 %v237, %v508
    %v510 = vpop.f32.mrf.mxu0
    %v511 = vadd.f32 %v241, %v510
    %512 = vmatprep.mubr.f32.mxu0 0.0
    %513 = vmatmul.mubr.f32.gmra.mxu0 %v84
    %v514 = vpop.f32.mrf.mxu0
    %v515 = vadd.f32 %v237, %v514
    %v516 = vpop.f32.mrf.mxu0
    %v517 = vadd.f32 %v241, %v516
    %518 = vmatprep.mubr.f32.mxu0 0.0
    %519 = vmatmul.mubr.f32.gmra.mxu0 %v85
    %v520 = vpop.f32.mrf.mxu0
    %v521 = vadd.f32 %v237, %v520
    %v522 = vpop.f32.mrf.mxu0
    %v523 = vadd.f32 %v241, %v522
    %524 = vdwg.mxu0
    %525 = vmatprep.subr.mxu0 %v213
    %526 = vmatpush1.msra.mxu0 %v212
    %527 = vmatprep.subr.mxu0 %v205
    %528 = vmatpush1.msra.mxu0 %v204
    %529 = vmatprep.subr.mxu0 %v197
    %530 = vmatpush1.msra.mxu0 %v196
    %531 = vmatprep.subr.mxu0 %v189
    %532 = vmatpush1.msra.mxu0 %v188
    %533 = vmatprep.subr.mxu0 %v181
    %534 = vmatpush1.msra.mxu0 %v180
    %535 = vmatprep.subr.mxu0 %v173
    %536 = vmatpush1.msra.mxu0 %v172
    %537 = vmatprep.subr.mxu0 %v165
    %538 = vmatpush1.msra.mxu0 %v164
    %539 = vmatprep.subr.mxu0 %v157
    %540 = vmatpush1.msra.mxu0 %v156
    %541 = vmatprep.subr.mxu0 %v149
    %542 = vmatpush1.msra.mxu0 %v148
    %543 = vmatprep.subr.mxu0 %v141
    %544 = vmatpush1.msra.mxu0 %v140
    %545 = vmatprep.subr.mxu0 %v133
    %546 = vmatpush1.msra.mxu0 %v132
    %547 = vmatprep.subr.mxu0 %v125
    %548 = vmatpush1.msra.mxu0 %v124
    %549 = vmatprep.subr.mxu0 %v117
    %550 = vmatpush1.msra.mxu0 %v116
    %551 = vmatprep.subr.mxu0 %v109
    %552 = vmatpush1.msra.mxu0 %v108
    %553 = vmatprep.subr.mxu0 %v101
    %554 = vmatpush1.msra.mxu0 %v100
    %555 = vmatprep.subr.mxu0 %v93
    %556 = vmatpush1.msra.mxu0 %v92
    %557 = vmatprep.subr.mxu0 0.0
    %558 = vmatpush2.msra.mxu0 0.0
    %559 = vmatprep.subr.mxu0 0.0
    %560 = vmatpush2.msra.mxu0 0.0
    %561 = vmatprep.subr.mxu0 0.0
    %562 = vmatpush2.msra.mxu0 0.0
    %563 = vmatprep.subr.mxu0 0.0
    %564 = vmatpush2.msra.mxu0 0.0
    %565 = vmatprep.subr.mxu0 0.0
    %566 = vmatpush2.msra.mxu0 0.0
    %567 = vmatprep.subr.mxu0 0.0
    %568 = vmatpush2.msra.mxu0 0.0
    %569 = vmatprep.subr.mxu0 0.0
    %570 = vmatpush2.msra.mxu0 0.0
    %571 = vmatprep.subr.mxu0 0.0
    %572 = vmatpush2.msra.mxu0 0.0
    %573 = vmatprep.subr.mxu0 0.0
    %574 = vmatpush2.msra.mxu0 0.0
    %575 = vmatprep.subr.mxu0 0.0
    %576 = vmatpush2.msra.mxu0 0.0
    %577 = vmatprep.subr.mxu0 0.0
    %578 = vmatpush2.msra.mxu0 0.0
    %579 = vmatprep.subr.mxu0 0.0
    %580 = vmatpush2.msra.mxu0 0.0
    %581 = vmatprep.subr.mxu0 0.0
    %582 = vmatpush2.msra.mxu0 0.0
    %583 = vmatprep.subr.mxu0 0.0
    %584 = vmatpush2.msra.mxu0 0.0
    %585 = vmatprep.subr.mxu0 0.0
    %586 = vmatpush2.msra.mxu0 0.0
    %587 = vmatprep.subr.mxu0 0.0
    %588 = vmatpush2.msra.mxu0 0.0
    %589 = vmatprep.mubr.f32.mxu0 0.0
    %590 = vmatmul.mubr.f32.gmra.mxu0 %v82
    %v591 = vpop.f32.mrf.mxu0
    %v592 = vadd.f32 %v245, %v591
    %v593 = vpop.f32.mrf.mxu0
    %v594 = vadd.f32 %v249, %v593
    %595 = vmatprep.mubr.f32.mxu0 0.0
    %596 = vmatmul.mubr.f32.gmra.mxu0 %v83
    %v597 = vpop.f32.mrf.mxu0
    %v598 = vadd.f32 %v245, %v597
    %v599 = vpop.f32.mrf.mxu0
    %v600 = vadd.f32 %v249, %v599
    %601 = vmatprep.mubr.f32.mxu0 0.0
    %602 = vmatmul.mubr.f32.gmra.mxu0 %v84
    %v603 = vpop.f32.mrf.mxu0
    %v604 = vadd.f32 %v245, %v603
    %v605 = vpop.f32.mrf.mxu0
    %v606 = vadd.f32 %v249, %v605
    %607 = vmatprep.mubr.f32.mxu0 0.0
    %608 = vmatmul.mubr.f32.gmra.mxu0 %v85
    %v609 = vpop.f32.mrf.mxu0
    %v610 = vadd.f32 %v245, %v609
    %v611 = vpop.f32.mrf.mxu0
    %v612 = vadd.f32 %v249, %v611
    %613 = vdwg.mxu0
    %v614 = vxor.u32 %v325, 2147483648
    %v615 = vxor.u32 %v327, 2147483648
    %v616 = vxor.u32 %v414, 2147483648
    %v617 = vxor.u32 %v416, 2147483648
    %v618 = vxor.u32 %v331, 2147483648
    %v619 = vxor.u32 %v333, 2147483648
    %v620 = vxor.u32 %v420, 2147483648
    %v621 = vxor.u32 %v422, 2147483648
    %v622 = vxor.u32 %v337, 2147483648
    %v623 = vxor.u32 %v339, 2147483648
    %v624 = vxor.u32 %v426, 2147483648
    %v625 = vxor.u32 %v428, 2147483648
    %v626 = vxor.u32 %v343, 2147483648
    %v627 = vxor.u32 %v345, 2147483648
    %v628 = vxor.u32 %v432, 2147483648
    %v629 = vxor.u32 %v434, 2147483648
    %v630 = vmul.f32 %v614, 1.442695
    %v631 = vpow.pop %v630
    %v632 = vmul.f32 %v615, 1.442695
    %v633 = vpow.pop %v632
    %v634 = vmul.f32 %v616, 1.442695
    %v635 = vpow.pop %v634
    %v636 = vmul.f32 %v617, 1.442695
    %v637 = vpow.pop %v636
    %v638 = vmul.f32 %v618, 1.442695
    %v639 = vpow.pop %v638
    %v640 = vmul.f32 %v619, 1.442695
    %v641 = vpow.pop %v640
    %v642 = vmul.f32 %v620, 1.442695
    %v643 = vpow.pop %v642
    %v644 = vmul.f32 %v621, 1.442695
    %v645 = vpow.pop %v644
    %v646 = vmul.f32 %v622, 1.442695
    %v647 = vpow.pop %v646
    %v648 = vmul.f32 %v623, 1.442695
    %v649 = vpow.pop %v648
    %v650 = vmul.f32 %v624, 1.442695
    %v651 = vpow.pop %v650
    %v652 = vmul.f32 %v625, 1.442695
    %v653 = vpow.pop %v652
    %v654 = vmul.f32 %v626, 1.442695
    %v655 = vpow.pop %v654
    %v656 = vmul.f32 %v627, 1.442695
    %v657 = vpow.pop %v656
    %v658 = vmul.f32 %v628, 1.442695
    %v659 = vpow.pop %v658
    %v660 = vmul.f32 %v629, 1.442695
    %v661 = vpow.pop %v660
    %v662 = vadd.f32 %v631, 1.0
    %v663 = vadd.f32 %v633, 1.0
    %v664 = vadd.f32 %v635, 1.0
    %v665 = vadd.f32 %v637, 1.0
    %v666 = vadd.f32 %v639, 1.0
    %v667 = vadd.f32 %v641, 1.0
    %v668 = vadd.f32 %v643, 1.0
    %v669 = vadd.f32 %v645, 1.0
    %v670 = vadd.f32 %v647, 1.0
    %v671 = vadd.f32 %v649, 1.0
    %v672 = vadd.f32 %v651, 1.0
    %v673 = vadd.f32 %v653, 1.0
    %v674 = vadd.f32 %v655, 1.0
    %v675 = vadd.f32 %v657, 1.0
    %v676 = vadd.f32 %v659, 1.0
    %v677 = vadd.f32 %v661, 1.0
    %v678 = vrcp.pop %v662
    %v679 = vmul.f32 1.0, %v678
    %v680 = vrcp.pop %v663
    %v681 = vmul.f32 1.0, %v680
    %v682 = vrcp.pop %v664
    %v683 = vmul.f32 1.0, %v682
    %v684 = vrcp.pop %v665
    %v685 = vmul.f32 1.0, %v684
    %v686 = vrcp.pop %v666
    %v687 = vmul.f32 1.0, %v686
    %v688 = vrcp.pop %v667
    %v689 = vmul.f32 1.0, %v688
    %v690 = vrcp.pop %v668
    %v691 = vmul.f32 1.0, %v690
    %v692 = vrcp.pop %v669
    %v693 = vmul.f32 1.0, %v692
    %v694 = vrcp.pop %v670
    %v695 = vmul.f32 1.0, %v694
    %v696 = vrcp.pop %v671
    %v697 = vmul.f32 1.0, %v696
    %v698 = vrcp.pop %v672
    %v699 = vmul.f32 1.0, %v698
    %v700 = vrcp.pop %v673
    %v701 = vmul.f32 1.0, %v700
    %v702 = vrcp.pop %v674
    %v703 = vmul.f32 1.0, %v702
    %v704 = vrcp.pop %v675
    %v705 = vmul.f32 1.0, %v704
    %v706 = vrcp.pop %v676
    %v707 = vmul.f32 1.0, %v706
    %v708 = vrcp.pop %v677
    %v709 = vmul.f32 1.0, %v708
    %v710 = vmul.f32 %v325, %v679
    %v711 = vmul.f32 %v327, %v681
    %v712 = vmul.f32 %v414, %v683
    %v713 = vmul.f32 %v416, %v685
    %v714 = vmul.f32 %v331, %v687
    %v715 = vmul.f32 %v333, %v689
    %v716 = vmul.f32 %v420, %v691
    %v717 = vmul.f32 %v422, %v693
    %v718 = vmul.f32 %v337, %v695
    %v719 = vmul.f32 %v339, %v697
    %v720 = vmul.f32 %v426, %v699
    %v721 = vmul.f32 %v428, %v701
    %v722 = vmul.f32 %v343, %v703
    %v723 = vmul.f32 %v345, %v705
    %v724 = vmul.f32 %v432, %v707
    %v725 = vmul.f32 %v434, %v709
    %v726 = vmul.f32 %v710, %v503
    %v727 = vmul.f32 %v711, %v505
    %v728 = vmul.f32 %v712, %v592
    %v729 = vmul.f32 %v713, %v594
    %v730 = vmul.f32 %v714, %v509
    %v731 = vmul.f32 %v715, %v511
    %v732 = vmul.f32 %v716, %v598
    %v733 = vmul.f32 %v717, %v600
    %v734 = vmul.f32 %v718, %v515
    %v735 = vmul.f32 %v719, %v517
    %v736 = vmul.f32 %v720, %v604
    %v737 = vmul.f32 %v721, %v606
    %v738 = vmul.f32 %v722, %v521
    %v739 = vmul.f32 %v723, %v523
    %v740 = vmul.f32 %v724, %v610
    %v741 = vmul.f32 %v725, %v612
    %v742 = vld [vmem:[#allocation2] sm:$0xff]
    %v743 = vld [vmem:[#allocation2 + $0x8] sm:$0xff]
    %v744 = vld [vmem:[#allocation2 + $0x10] sm:$0xff]
    %v745 = vld [vmem:[#allocation2 + $0x18] sm:$0xff]
    %v746 = vld [vmem:[#allocation9] sm:$0xff]
    %v747 = vld [vmem:[#allocation9 + $0x8] sm:$0xff]
    %v748 = vld [vmem:[#allocation9 + $0x10] sm:$0xff]
    %v749 = vld [vmem:[#allocation9 + $0x18] sm:$0xff]
    %v750 = vld [vmem:[#allocation9 + $0x20] sm:$0xff]
    %v751 = vld [vmem:[#allocation9 + $0x28] sm:$0xff]
    %v752 = vld [vmem:[#allocation9 + $0x30] sm:$0xff]
    %v753 = vld [vmem:[#allocation9 + $0x38] sm:$0xff]
    %v754 = vld [vmem:[#allocation9 + $0x40] sm:$0xff]
    %v755 = vld [vmem:[#allocation9 + $0x48] sm:$0xff]
    %v756 = vld [vmem:[#allocation9 + $0x50] sm:$0xff]
    %v757 = vld [vmem:[#allocation9 + $0x58] sm:$0xff]
    %v758 = vld [vmem:[#allocation9 + $0x60] sm:$0xff]
    %v759 = vld [vmem:[#allocation9 + $0x68] sm:$0xff]
    %v760 = vld [vmem:[#allocation9 + $0x70] sm:$0xff]
    %v761 = vld [vmem:[#allocation9 + $0x78] sm:$0xff]
    %v762 = vld [vmem:[#allocation9 + $0x80] sm:$0xff]
    %v763 = vld [vmem:[#allocation9 + $0x88] sm:$0xff]
    %v764 = vld [vmem:[#allocation9 + $0x90] sm:$0xff]
    %v765 = vld [vmem:[#allocation9 + $0x98] sm:$0xff]
    %v766 = vld [vmem:[#allocation9 + $0xa0] sm:$0xff]
    %v767 = vld [vmem:[#allocation9 + $0xa8] sm:$0xff]
    %v768 = vld [vmem:[#allocation9 + $0xb0] sm:$0xff]
    %v769 = vld [vmem:[#allocation9 + $0xb8] sm:$0xff]
    %v770 = vld [vmem:[#allocation9 + $0xc0] sm:$0xff]
    %v771 = vld [vmem:[#allocation9 + $0xc8] sm:$0xff]
    %v772 = vld [vmem:[#allocation9 + $0xd0] sm:$0xff]
    %v773 = vld [vmem:[#allocation9 + $0xd8] sm:$0xff]
    %v774 = vld [vmem:[#allocation9 + $0xe0] sm:$0xff]
    %v775 = vld [vmem:[#allocation9 + $0xe8] sm:$0xff]
    %v776 = vld [vmem:[#allocation9 + $0xf0] sm:$0xff]
    %v777 = vld [vmem:[#allocation9 + $0xf8] sm:$0xff]
    %v778 = vld [vmem:[#allocation9 + $0x100] sm:$0xff]
    %v779 = vld [vmem:[#allocation9 + $0x108] sm:$0xff]
    %v780 = vld [vmem:[#allocation9 + $0x110] sm:$0xff]
    %v781 = vld [vmem:[#allocation9 + $0x118] sm:$0xff]
    %v782 = vld [vmem:[#allocation9 + $0x120] sm:$0xff]
    %v783 = vld [vmem:[#allocation9 + $0x128] sm:$0xff]
    %v784 = vld [vmem:[#allocation9 + $0x130] sm:$0xff]
    %v785 = vld [vmem:[#allocation9 + $0x138] sm:$0xff]
    %v786 = vld [vmem:[#allocation9 + $0x140] sm:$0xff]
    %v787 = vld [vmem:[#allocation9 + $0x148] sm:$0xff]
    %v788 = vld [vmem:[#allocation9 + $0x150] sm:$0xff]
    %v789 = vld [vmem:[#allocation9 + $0x158] sm:$0xff]
    %v790 = vld [vmem:[#allocation9 + $0x160] sm:$0xff]
    %v791 = vld [vmem:[#allocation9 + $0x168] sm:$0xff]
    %v792 = vld [vmem:[#allocation9 + $0x170] sm:$0xff]
    %v793 = vld [vmem:[#allocation9 + $0x178] sm:$0xff]
    %v794 = vld [vmem:[#allocation9 + $0x180] sm:$0xff]
    %v795 = vld [vmem:[#allocation9 + $0x188] sm:$0xff]
    %v796 = vld [vmem:[#allocation9 + $0x190] sm:$0xff]
    %v797 = vld [vmem:[#allocation9 + $0x198] sm:$0xff]
    %v798 = vld [vmem:[#allocation9 + $0x1a0] sm:$0xff]
    %v799 = vld [vmem:[#allocation9 + $0x1a8] sm:$0xff]
    %v800 = vld [vmem:[#allocation9 + $0x1b0] sm:$0xff]
    %v801 = vld [vmem:[#allocation9 + $0x1b8] sm:$0xff]
    %v802 = vld [vmem:[#allocation9 + $0x1c0] sm:$0xff]
    %v803 = vld [vmem:[#allocation9 + $0x1c8] sm:$0xff]
    %v804 = vld [vmem:[#allocation9 + $0x1d0] sm:$0xff]
    %v805 = vld [vmem:[#allocation9 + $0x1d8] sm:$0xff]
    %v806 = vld [vmem:[#allocation9 + $0x1e0] sm:$0xff]
    %v807 = vld [vmem:[#allocation9 + $0x1e8] sm:$0xff]
    %v808 = vld [vmem:[#allocation9 + $0x1f0] sm:$0xff]
    %v809 = vld [vmem:[#allocation9 + $0x1f8] sm:$0xff]
    %810 = vmatprep.subr.mxu0 0.0
    %811 = vmatpush1.msra.mxu0 %v761
    %812 = vmatprep.subr.mxu0 0.0
    %813 = vmatpush1.msra.mxu0 %v760
    %814 = vmatprep.subr.mxu0 0.0
    %815 = vmatpush1.msra.mxu0 %v759
    %816 = vmatprep.subr.mxu0 0.0
    %817 = vmatpush1.msra.mxu0 %v758
    %818 = vmatprep.subr.mxu0 0.0
    %819 = vmatpush1.msra.mxu0 %v757
    %820 = vmatprep.subr.mxu0 0.0
    %821 = vmatpush1.msra.mxu0 %v756
    %822 = vmatprep.subr.mxu0 0.0
    %823 = vmatpush1.msra.mxu0 %v755
    %824 = vmatprep.subr.mxu0 0.0
    %825 = vmatpush1.msra.mxu0 %v754
    %826 = vmatprep.subr.mxu0 0.0
    %827 = vmatpush1.msra.mxu0 %v753
    %828 = vmatprep.subr.mxu0 0.0
    %829 = vmatpush1.msra.mxu0 %v752
    %830 = vmatprep.subr.mxu0 0.0
    %831 = vmatpush1.msra.mxu0 %v751
    %832 = vmatprep.subr.mxu0 0.0
    %833 = vmatpush1.msra.mxu0 %v750
    %834 = vmatprep.subr.mxu0 0.0
    %835 = vmatpush1.msra.mxu0 %v749
    %836 = vmatprep.subr.mxu0 0.0
    %837 = vmatpush1.msra.mxu0 %v748
    %838 = vmatprep.subr.mxu0 0.0
    %839 = vmatpush1.msra.mxu0 %v747
    %840 = vmatprep.subr.mxu0 0.0
    %841 = vmatpush1.msra.mxu0 %v746
    %842 = vmatprep.subr.mxu0 0.0
    %843 = vmatpush2.msra.mxu0 %v777
    %844 = vmatprep.subr.mxu0 0.0
    %845 = vmatpush2.msra.mxu0 %v776
    %846 = vmatprep.subr.mxu0 0.0
    %847 = vmatpush2.msra.mxu0 %v775
    %848 = vmatprep.subr.mxu0 0.0
    %849 = vmatpush2.msra.mxu0 %v774
    %850 = vmatprep.subr.mxu0 0.0
    %851 = vmatpush2.msra.mxu0 %v773
    %852 = vmatprep.subr.mxu0 0.0
    %853 = vmatpush2.msra.mxu0 %v772
    %854 = vmatprep.subr.mxu0 0.0
    %855 = vmatpush2.msra.mxu0 %v771
    %856 = vmatprep.subr.mxu0 0.0
    %857 = vmatpush2.msra.mxu0 %v770
    %858 = vmatprep.subr.mxu0 0.0
    %859 = vmatpush2.msra.mxu0 %v769
    %860 = vmatprep.subr.mxu0 0.0
    %861 = vmatpush2.msra.mxu0 %v768
    %862 = vmatprep.subr.mxu0 0.0
    %863 = vmatpush2.msra.mxu0 %v767
    %864 = vmatprep.subr.mxu0 0.0
    %865 = vmatpush2.msra.mxu0 %v766
    %866 = vmatprep.subr.mxu0 0.0
    %867 = vmatpush2.msra.mxu0 %v765
    %868 = vmatprep.subr.mxu0 0.0
    %869 = vmatpush2.msra.mxu0 %v764
    %870 = vmatprep.subr.mxu0 0.0
    %871 = vmatpush2.msra.mxu0 %v763
    %872 = vmatprep.subr.mxu0 0.0
    %873 = vmatpush2.msra.mxu0 %v762
    %874 = vmatprep.mubr.f32.mxu0 %v727
    %875 = vmatmul.mubr.f32.gmra.mxu0 %v726
    %v876 = vpop.f32.mrf.mxu0
    %v877 = vadd.f32 0.0, %v876
    %v878 = vpop.f32.mrf.mxu0
    %879 = vmatprep.mubr.f32.mxu0 %v731
    %880 = vmatmul.mubr.f32.gmra.mxu0 %v730
    %v881 = vpop.f32.mrf.mxu0
    %v882 = vadd.f32 0.0, %v881
    %v883 = vpop.f32.mrf.mxu0
    %884 = vmatprep.mubr.f32.mxu0 %v735
    %885 = vmatmul.mubr.f32.gmra.mxu0 %v734
    %v886 = vpop.f32.mrf.mxu0
    %v887 = vadd.f32 0.0, %v886
    %v888 = vpop.f32.mrf.mxu0
    %889 = vmatprep.mubr.f32.mxu0 %v739
    %890 = vmatmul.mubr.f32.gmra.mxu0 %v738
    %v891 = vpop.f32.mrf.mxu0
    %v892 = vadd.f32 0.0, %v891
    %v893 = vpop.f32.mrf.mxu0
    %894 = vdwg.mxu0
    %895 = vmatprep.subr.mxu0 0.0
    %896 = vmatpush1.msra.mxu0 %v793
    %897 = vmatprep.subr.mxu0 0.0
    %898 = vmatpush1.msra.mxu0 %v792
    %899 = vmatprep.subr.mxu0 0.0
    %900 = vmatpush1.msra.mxu0 %v791
    %901 = vmatprep.subr.mxu0 0.0
    %902 = vmatpush1.msra.mxu0 %v790
    %903 = vmatprep.subr.mxu0 0.0
    %904 = vmatpush1.msra.mxu0 %v789
    %905 = vmatprep.subr.mxu0 0.0
    %906 = vmatpush1.msra.mxu0 %v788
    %907 = vmatprep.subr.mxu0 0.0
    %908 = vmatpush1.msra.mxu0 %v787
    %909 = vmatprep.subr.mxu0 0.0
    %910 = vmatpush1.msra.mxu0 %v786
    %911 = vmatprep.subr.mxu0 0.0
    %912 = vmatpush1.msra.mxu0 %v785
    %913 = vmatprep.subr.mxu0 0.0
    %914 = vmatpush1.msra.mxu0 %v784
    %915 = vmatprep.subr.mxu0 0.0
    %916 = vmatpush1.msra.mxu0 %v783
    %917 = vmatprep.subr.mxu0 0.0
    %918 = vmatpush1.msra.mxu0 %v782
    %919 = vmatprep.subr.mxu0 0.0
    %920 = vmatpush1.msra.mxu0 %v781
    %921 = vmatprep.subr.mxu0 0.0
    %922 = vmatpush1.msra.mxu0 %v780
    %923 = vmatprep.subr.mxu0 0.0
    %924 = vmatpush1.msra.mxu0 %v779
    %925 = vmatprep.subr.mxu0 0.0
    %926 = vmatpush1.msra.mxu0 %v778
    %927 = vmatprep.subr.mxu0 0.0
    %928 = vmatpush2.msra.mxu0 %v809
    %929 = vmatprep.subr.mxu0 0.0
    %930 = vmatpush2.msra.mxu0 %v808
    %931 = vmatprep.subr.mxu0 0.0
    %932 = vmatpush2.msra.mxu0 %v807
    %933 = vmatprep.subr.mxu0 0.0
    %934 = vmatpush2.msra.mxu0 %v806
    %935 = vmatprep.subr.mxu0 0.0
    %936 = vmatpush2.msra.mxu0 %v805
    %937 = vmatprep.subr.mxu0 0.0
    %938 = vmatpush2.msra.mxu0 %v804
    %939 = vmatprep.subr.mxu0 0.0
    %940 = vmatpush2.msra.mxu0 %v803
    %941 = vmatprep.subr.mxu0 0.0
    %942 = vmatpush2.msra.mxu0 %v802
    %943 = vmatprep.subr.mxu0 0.0
    %944 = vmatpush2.msra.mxu0 %v801
    %945 = vmatprep.subr.mxu0 0.0
    %946 = vmatpush2.msra.mxu0 %v800
    %947 = vmatprep.subr.mxu0 0.0
    %948 = vmatpush2.msra.mxu0 %v799
    %949 = vmatprep.subr.mxu0 0.0
    %950 = vmatpush2.msra.mxu0 %v798
    %951 = vmatprep.subr.mxu0 0.0
    %952 = vmatpush2.msra.mxu0 %v797
    %953 = vmatprep.subr.mxu0 0.0
    %954 = vmatpush2.msra.mxu0 %v796
    %955 = vmatprep.subr.mxu0 0.0
    %956 = vmatpush2.msra.mxu0 %v795
    %957 = vmatprep.subr.mxu0 0.0
    %958 = vmatpush2.msra.mxu0 %v794
    %959 = vmatprep.mubr.f32.mxu0 %v729
    %960 = vmatmul.mubr.f32.gmra.mxu0 %v728
    %v961 = vpop.f32.mrf.mxu0
    %v962 = vadd.f32 %v877, %v961
    %v963 = vpop.f32.mrf.mxu0
    %964 = vmatprep.mubr.f32.mxu0 %v733
    %965 = vmatmul.mubr.f32.gmra.mxu0 %v732
    %v966 = vpop.f32.mrf.mxu0
    %v967 = vadd.f32 %v882, %v966
    %v968 = vpop.f32.mrf.mxu0
    %969 = vmatprep.mubr.f32.mxu0 %v737
    %970 = vmatmul.mubr.f32.gmra.mxu0 %v736
    %v971 = vpop.f32.mrf.mxu0
    %v972 = vadd.f32 %v887, %v971
    %v973 = vpop.f32.mrf.mxu0
    %974 = vmatprep.mubr.f32.mxu0 %v741
    %975 = vmatmul.mubr.f32.gmra.mxu0 %v740
    %v976 = vpop.f32.mrf.mxu0
    %v977 = vadd.f32 %v892, %v976
    %v978 = vpop.f32.mrf.mxu0
    %979 = vdwg.mxu0
    %v980 = vadd.f32 %v742, %v962
    %v981 = vadd.f32 %v743, %v967
    %v982 = vadd.f32 %v744, %v972
    %v983 = vadd.f32 %v745, %v977
    %984 = vst [vmem:[#allocation2] sm:$0xff] %v980
    %985 = vst [vmem:[#allocation2 + $0x8] sm:$0xff] %v981
    %986 = vst [vmem:[#allocation2 + $0x10] sm:$0xff] %v982
    %987 = vst [vmem:[#allocation2 + $0x18] sm:$0xff] %v983
    // Predicated region
    $region42: #{tpu_custom_call.1} parent=1 // pred_check
      %p988 = pneg %p74
    $region43: #{tpu_custom_call.1} parent=1 // pred_check_branch
      %990 = sbr.rel (%p988) target = $region45
    $region44: #{tpu_custom_call.1} parent=1 // pred_region
      %v991 = vld [vmem:[#allocation2] sm:$0xff]
      %v992 = vld [vmem:[#allocation2 + $0x8] sm:$0xff]
      %v993 = vld [vmem:[#allocation2 + $0x10] sm:$0xff]
      %v994 = vld [vmem:[#allocation2 + $0x18] sm:$0xff]
      %v995 = vld [vmem:[%s4] sm:$0x1]
      %v997 = vlaneseq
      %v998 = vshrl.u32 %v997, 7
      %v999 = vsub.s32 0, %v998
      %v1000 = vrot.slane %v995, %v999
      %v1002 = vadd.f32 %v991, %v1000
      %v1003 = vadd.f32 %v992, %v1000
      %v1004 = vadd.f32 %v993, %v1000
      %v1005 = vadd.f32 %v994, %v1000
      %1006 = vst [vmem:[#allocation11] sm:$0xff] %v1002
      %1007 = vst [vmem:[#allocation11 + $0x8] sm:$0xff] %v1003
      %1008 = vst [vmem:[#allocation11 + $0x10] sm:$0xff] %v1004
      %1009 = vst [vmem:[#allocation11 + $0x18] sm:$0xff] %v1005
    $region45: #{tpu_custom_call.1} parent=1 // pred_fallthru
      _
    // Predicated region
    $region46: #{tpu_custom_call.1} parent=1 // pred_check
      _
    $region47: #{tpu_custom_call.1} parent=1 // pred_check_branch
      %1011 = sbr.rel (0) target = $region49
    $region48: #{tpu_custom_call.1} parent=1 // pred_region
      %s1013 = ssub.s32 512, 512
      %1014 = vsyncadd [#allocation5], %s1013
      %s1015 = sshll.u32 [#allocation11], 4
      %s1016 = int_to_ptr.vmem [resolvable:$true] %s1015
      %1021 = dma.vmem_to_hbm [thread:$0]  %s1016, 512, %s5, [#allocation5], 128, 128, 8
    $region49: #{tpu_custom_call.1} parent=1 // pred_fallthru
      _
    // Predicated region
    $region50: #{tpu_custom_call.1} parent=1 // pred_check
      _
    $region51: #{tpu_custom_call.1} parent=1 // pred_check_branch
      %1023 = sbr.rel (0) target = $region53
    $region52: #{tpu_custom_call.1} parent=1 // pred_region
      %1024 = dma.done [#allocation5], 512
    $region53: #{tpu_custom_call.1} parent=1 // pred_fallthru
      _
    %1025 = vsyncpa [#allocation4], 1
    %1026 = vsyncpa [#allocation7], 1
    %1027 = vsyncpa [#allocation10], 1
    %1028 = vsyncpa [#allocation5], 1

</llo_original>
